<compile_context>
chip_gen: v5e
topology: v5e:2x2
jax: 0.10.0
libtpu: 0.0.40
codegen_flags: <defaults>
</compile_context>

<pallas_src>
import functools

import jax
import jax.numpy as jnp
from jax.experimental import pallas as pl
from jax.experimental.pallas import tpu as pltpu


# ----------------------------------------------------------------------------
# Kernel: one fused GEMM per bt-row tile.  All sampling / pooling / feature
# constants were folded into m_ref by the wrapper, so the body is MXU-only.
# ----------------------------------------------------------------------------
def _readout_gemm_kernel(z_ref, m_ref, b_ref, o_ref):
    o_ref[...] = (jnp.dot(z_ref[...], m_ref[...],
                          preferred_element_type=jnp.float32)
                  + b_ref[...]).astype(o_ref.dtype)


def _pool_dims(w, h, pool_steps, ksize, stride):
    dims = [(w, h)]
    for _ in range(pool_steps):
        pw, ph = dims[-1]
        dims.append(((pw - ksize) // stride + 1, (ph - ksize) // stride + 1))
    return dims


def _build_readout_matrix(grid, features, c, w, h, pool_steps, ksize, stride):
    """Fold bilinear sampling (+grid-point mean), the avg-pool pyramid and the
    feature weights into a single (c*w*h, outdims) matrix.  Pure JAX; runs once
    per call (constant w.r.t. the activations)."""
    m = pool_steps + 1
    outdims, gp = grid.shape[1], grid.shape[2]
    OG = outdims * gp
    g = jnp.clip(grid, -1.0, 1.0).astype(jnp.float32)    # torch.clamp(grid,-1,1)
    gx = g[0, :, :, 0].reshape(OG)                       # x indexes width (h axis)
    gy = g[0, :, :, 1].reshape(OG)                       # y indexes height (w axis)

    dims = _pool_dims(w, h, pool_steps, ksize, stride)
    WH0 = w * h
    pcomp = jnp.eye(WH0, dtype=jnp.float32)              # full-res -> scale-s pool map
    A = []                                               # per-scale (w*h, outdims)
    for s in range(m):
        ws, hs = dims[s]
        WH = ws * hs
        p = jnp.arange(WH)
        py = (p // hs).astype(jnp.float32)[:, None]      # (WH, 1)
        px = (p % hs).astype(jnp.float32)[:, None]
        # F.grid_sample semantics: bilinear, padding_mode='zeros',
        # align_corners=False.  Out-of-range taps never match the equality
        # masks, reproducing zero padding; indices are exactly representable
        # in f32 at these spatial sizes.
        ix = ((gx + 1.0) * hs - 1.0) * 0.5               # (OG,)
        iy = ((gy + 1.0) * ws - 1.0) * 0.5
        ix0, iy0 = jnp.floor(ix), jnp.floor(iy)
        wx1, wy1 = ix - ix0, iy - iy0
        sx = (jnp.where(px == ix0[None, :], 1.0 - wx1, 0.0)
              + jnp.where(px == ix0[None, :] + 1.0, wx1, 0.0))
        sy = (jnp.where(py == iy0[None, :], 1.0 - wy1, 0.0)
              + jnp.where(py == iy0[None, :] + 1.0, wy1, 0.0))
        samp = sx * sy                                   # (WH, OG)
        sbar = samp.reshape(WH, outdims, gp).mean(axis=2)    # mean over grid pts
        A.append(pcomp @ sbar)                           # (w*h, outdims)
        if s + 1 < m:
            wn, hn = dims[s + 1]
            WHn = wn * hn
            ppy, ppx = jnp.arange(WH) // hs, jnp.arange(WH) % hs
            qy, qx = jnp.arange(WHn) // hn, jnp.arange(WHn) % hn
            # AvgPool2d(ksize, stride), padding=0, floor mode: every window is
            # fully inside, so count_include_pad is irrelevant.
            inside = ((ppy[:, None] >= qy[None, :] * stride)
                      & (ppy[:, None] < qy[None, :] * stride + ksize)
                      & (ppx[:, None] >= qx[None, :] * stride)
                      & (ppx[:, None] < qx[None, :] * stride + ksize))
            pmat = jnp.where(inside, 1.0 / (ksize * ksize), 0.0)   # (WH, WHn)
            pcomp = pcomp @ pmat

    A = jnp.stack(A, axis=0)                             # (m, w*h, outdims)
    feat = features.reshape(m, c, outdims).astype(jnp.float32)
    M = jnp.einsum('spo,sco->cpo', A, feat).reshape(c * WH0, outdims)
    return M


@functools.partial(jax.jit, static_argnames=(
    "pool_steps", "kernel_size", "stride", "block_rows", "compute_dtype"))
def spatial_transformer_x_pooled_3d(x, grid, features, bias, *,
                                    pool_steps=1, kernel_size=4, stride=4,
                                    block_rows=128,
                                    compute_dtype=jnp.bfloat16):
    """x: (N, c, t, w, h); grid: (1, outdims, grid_points, 2);
    features: (1, c*(pool_steps+1), 1, outdims); bias: (outdims,).
    Returns (N, t, outdims) float32."""
    N, c, t, w, h = x.shape
    outdims = grid.shape[1]
    Nt = N * t
    K = c * w * h

    # ---- constants folded once (hoisted out of the kernel) ------------------
    M = _build_readout_matrix(grid, features, c, w, h,
                              pool_steps, kernel_size, stride)       # (K, O)

    # Lane-dense output: pad outdims up to a multiple of 128 so the out tile
    # uses unmasked full-width stores; strip the padding after the call.
    O_pad = max(128, -(-outdims // 128) * 128)
    M_pad = jnp.zeros((K, O_pad), jnp.float32).at[:, :outdims].set(M)
    M_pad = M_pad.astype(compute_dtype)
    b_pad = jnp.zeros((1, O_pad), jnp.float32).at[0, :outdims].set(
        bias.astype(jnp.float32))

    # ---- activations: (N,c,t,w,h) -> (Nt, c*w*h), one pass, compute dtype ---
    # (matches x.transpose(2,1).view(-1, c, w, h) flattening; bf16 halves the
    #  extra HBM traffic of this re-layout)
    z2d = jnp.transpose(x, (0, 2, 1, 3, 4)).reshape(Nt, K).astype(compute_dtype)

    bt = min(block_rows, -(-Nt // 8) * 8)        # >= 8, multiple of 8
    Nt_pad = -(-Nt // bt) * bt
    if Nt_pad != Nt:
        z2d = jnp.pad(z2d, ((0, Nt_pad - Nt), (0, 0)))

    out = pl.pallas_call(
        _readout_gemm_kernel,
        out_shape=jax.ShapeDtypeStruct((Nt_pad, O_pad), jnp.float32),
        grid=(Nt_pad // bt,),
        in_specs=[
            pl.BlockSpec((bt, K), lambda i: (i, 0)),        # z rows tile
            pl.BlockSpec((K, O_pad), lambda i: (0, 0)),     # fused readout matrix
            pl.BlockSpec((1, O_pad), lambda i: (0, 0)),     # bias
        ],
        out_specs=pl.BlockSpec((bt, O_pad), lambda i: (i, 0)),
        compiler_params=pltpu.CompilerParams(
            dimension_semantics=("parallel",)),   # shard rows over v7x's 2 TCs
    )(z2d, M_pad, b_pad)
    return out[:Nt, :outdims].reshape(N, t, outdims)


# ----------------------------------------------------------------------------
# Pure-JAX reference reproducing the PyTorch forward (shift/subs_idx = None).
# ----------------------------------------------------------------------------
def _ref_forward(x, grid, features, bias, pool_steps=1, kernel_size=4, stride=4):
    N, c, t, w, h = x.shape
    m = pool_steps + 1
    outdims, G = grid.shape[1], grid.shape[2]
    g = jnp.clip(grid, -1.0, 1.0)[0]                    # (O, G, 2)
    z = jnp.transpose(x, (0, 2, 1, 3, 4)).reshape(N * t, c, w, h)
    feat = features.reshape(m * c, outdims)

    def bilinear(zz):
        B, C, W_, H_ = zz.shape
        gx, gy = g[..., 0], g[..., 1]
        ix = ((gx + 1.0) * H_ - 1.0) / 2.0
        iy = ((gy + 1.0) * W_ - 1.0) / 2.0
        ix0, iy0 = jnp.floor(ix), jnp.floor(iy)
        wx1, wy1 = ix - ix0, iy - iy0
        out = jnp.zeros((B, C, outdims, G), jnp.float32)
        for dy in (0, 1):
            for dx in (0, 1):
                yy, xx = iy0 + dy, ix0 + dx
                wgt = (wy1 if dy else 1.0 - wy1) * (wx1 if dx else 1.0 - wx1)
                valid = ((yy >= 0) & (yy < W_) & (xx >= 0) & (xx < H_)
                         ).astype(jnp.float32)
                yi = jnp.clip(yy, 0, W_ - 1).astype(jnp.int32)
                xi = jnp.clip(xx, 0, H_ - 1).astype(jnp.int32)
                out = out + zz[:, :, yi, xi] * (wgt * valid)[None, None]
        return out.mean(axis=3)                         # (B, C, O)

    pools, zz = [], z
    for s in range(m):
        if s > 0:
            zz = jax.lax.reduce_window(
                zz, jnp.float32(0.0), jax.lax.add,
                (1, 1, kernel_size, kernel_size),
                (1, 1, stride, stride), 'VALID') / (kernel_size * kernel_size)
        pools.append(bilinear(zz))
    y = jnp.zeros((N * t, outdims), jnp.float32)
    for s in range(m):
        for ch in range(c):
            y = y + pools[s][:, ch, :] * feat[s * c + ch][None, :]
    y = y + bias[None, :]
    return y.reshape(N, t, outdims)


if __name__ == "__main__":
    key = jax.random.PRNGKey(0)
    kx, kg, kf, kb = jax.random.split(key, 4)

    # module config (defaults): pool_steps=1, kernel_size=4, stride=4, bias=True
    N, c, t, w, h = 2, 4, 8, 16, 16
    outdims, grid_points, pool_steps = 8, 10, 1
    m = pool_steps + 1
    init_range = 0.2

    x = jax.random.normal(kx, (N, c, t, w, h), jnp.float32)
    grid = jax.random.uniform(kg, (1, outdims, grid_points, 2),
                              jnp.float32, -init_range, init_range)
    features = jax.random.normal(kf, (1, c * m, 1, outdims), jnp.float32) / c
    bias = jax.random.normal(kb, (outdims,), jnp.float32) * 0.1

    ref = _ref_forward(x, grid, features, bias, pool_steps=pool_steps)

    # f32 path: tight numerical check against the reference.
    out_f32 = spatial_transformer_x_pooled_3d(
        x, grid, features, bias, pool_steps=pool_steps, kernel_size=4,
        stride=4, block_rows=128, compute_dtype=jnp.float32)
    out_f32 = jax.block_until_ready(out_f32)
    assert out_f32.shape == (N, t, outdims)
    if not jnp.allclose(out_f32, ref, rtol=1e-4, atol=1e-4):
        raise AssertionError(
            f"f32 mismatch: max abs diff = "
            f"{float(jnp.max(jnp.abs(out_f32 - ref)))}")

    # bf16-input / f32-accumulate path (the fast MXU path on v6e/v7x);
    # tolerance loosened to bf16 mantissa precision.
    out_bf16 = spatial_transformer_x_pooled_3d(
        x, grid, features, bias, pool_steps=pool_steps, kernel_size=4,
        stride=4, block_rows=128, compute_dtype=jnp.bfloat16)
    out_bf16 = jax.block_until_ready(out_bf16)
    if not jnp.allclose(out_bf16, ref, rtol=3e-2, atol=3e-2):
        raise AssertionError(
            f"bf16 mismatch: max abs diff = "
            f"{float(jnp.max(jnp.abs(out_bf16 - ref)))}")

    print("KERNEL_OK")
</pallas_src>

<mosaic_0001>
module attributes {stable_mosaic.version = 11 : i64} {
  func.func @_readout_gemm_kernel(%arg0: i32, %arg1: memref<16x1024xf32, #tpu.memory_space<vmem>>, %arg2: memref<1024x128xf32, #tpu.memory_space<vmem>>, %arg3: memref<1x128xf32, #tpu.memory_space<vmem>>, %arg4: memref<16x128xf32, #tpu.memory_space<vmem>>) attributes {dimension_semantics = [#tpu.dimension_semantics<parallel>], iteration_bounds = array<i64: 1>, scalar_prefetch = 0 : i64, scratch_operands = 0 : i64, tpu.core_type = #tpu.core_type<tc>, window_params = [{transform_indices = @transform_0, window_bounds = array<i64: 16, 1024>}, {pipeline_mode = #tpu.pipeline_mode<synchronous>, transform_indices = @transform_1, window_bounds = array<i64: 1024, 128>}, {pipeline_mode = #tpu.pipeline_mode<synchronous>, transform_indices = @transform_2, window_bounds = array<i64: 1, 128>}, {transform_indices = @transform_3, window_bounds = array<i64: 16, 128>}]} {
    %c0 = arith.constant 0 : index
    %c0_0 = arith.constant 0 : index
    %0 = vector.load %arg1[%c0, %c0_0] : memref<16x1024xf32, #tpu.memory_space<vmem>>, vector<16x1024xf32>
    %c0_1 = arith.constant 0 : index
    %c0_2 = arith.constant 0 : index
    %1 = vector.load %arg2[%c0_1, %c0_2] : memref<1024x128xf32, #tpu.memory_space<vmem>>, vector<1024x128xf32>
    %cst = arith.constant dense<0.000000e+00> : vector<16x128xf32>
    %2 = tpu.matmul %0, %1, %cst {dimension_numbers = #tpu.dot_dimension_numbers<[1], [0], [0], [1], [0, 0, 1, 1], [], []>} : vector<16x1024xf32>, vector<1024x128xf32>, vector<16x128xf32> -> vector<16x128xf32>
    %c0_3 = arith.constant 0 : index
    %c0_4 = arith.constant 0 : index
    %3 = vector.load %arg3[%c0_3, %c0_4] : memref<1x128xf32, #tpu.memory_space<vmem>>, vector<1x128xf32>
    %4 = vector.broadcast %3 : vector<1x128xf32> to vector<16x128xf32>
    %5 = arith.addf %2, %4 : vector<16x128xf32>
    %c0_5 = arith.constant 0 : index
    %c0_6 = arith.constant 0 : index
    %6 = vector.load %arg4[%c0_5, %c0_6] : memref<16x128xf32, #tpu.memory_space<vmem>>, vector<16x128xf32>
    tpu.vector_store %arg4[%c0_5, %c0_6], %5 {strides = array<i32>} : memref<16x128xf32, #tpu.memory_space<vmem>>, vector<16x128xf32>,
    return
  }
  func.func @transform_0(%arg0: i32) -> (i32, i32) {
    %c0_i32 = arith.constant 0 : i32
    %c0_i32_0 = arith.constant 0 : i32
    return %arg0, %c0_i32 : i32, i32
  }
  func.func @transform_1(%arg0: i32) -> (i32, i32) {
    %c0_i32 = arith.constant 0 : i32
    %c0_i32_0 = arith.constant 0 : i32
    %c0_i32_1 = arith.constant 0 : i32
    return %c0_i32, %c0_i32_0 : i32, i32
  }
  func.func @transform_2(%arg0: i32) -> (i32, i32) {
    %c0_i32 = arith.constant 0 : i32
    %c0_i32_0 = arith.constant 0 : i32
    %c0_i32_1 = arith.constant 0 : i32
    return %c0_i32, %c0_i32_0 : i32, i32
  }
  func.func @transform_3(%arg0: i32) -> (i32, i32) {
    %c0_i32 = arith.constant 0 : i32
    %c0_i32_0 = arith.constant 0 : i32
    return %arg0, %c0_i32 : i32, i32
  }
}

</mosaic_0001>

<llo_original>
// kernel: spatial_transformer_x_pooled_3d.1
$region0: #{spatial_transformer_x_pooled_3d.1}
  #allocation0 [shape = 'u32[]', space=smem, size = 0x4, offset = 0x4, fixed_abs, tag = 'smem constant byte address 0x4 - core index']
  #allocation1 [shape = 'u32[72,128]{1,0:T(1,128)}', space=vmem, size = 0x9000, scoped, tag = 'internal scratch']
  %s0 = inlined_call_operand.vmem [shape: f32[16,1024], index: 0, kind: input, shape index: {}]
  %s1 = inlined_call_operand.vmem [shape: f32[1024,128], index: 1, kind: input, shape index: {}]
  %s2 = inlined_call_operand.vmem [shape: f32[1,128], index: 2, kind: input, shape index: {}]
  %s3 = inlined_call_operand.vmem [shape: f32[16,128], index: 3, kind: output, shape index: {}]
  %s4 = sld [smem:[#allocation0]]
  $region22: #{spatial_transformer_x_pooled_3d.1} parent=0
    _
  %s6 = ssub.s32 1, %s4
  %s7 = scalar_select 0, %s6, %s4
  // Predicated region
  $region2: #{spatial_transformer_x_pooled_3d.1} parent=0 // pred_check
    _
  $region3: #{spatial_transformer_x_pooled_3d.1} parent=0 // pred_check_branch
    %9 = sbr.rel (0) target = $region5
  $region4: #{spatial_transformer_x_pooled_3d.1} parent=0 // pred_region
    _
  $region5: #{spatial_transformer_x_pooled_3d.1} parent=0 // pred_fallthru
    _
  // Predicated region
  $region6: #{spatial_transformer_x_pooled_3d.1} parent=0 // pred_check
    _
  $region7: #{spatial_transformer_x_pooled_3d.1} parent=0 // pred_check_branch
    %11 = sbr.rel (0) target = $region9
  $region8: #{spatial_transformer_x_pooled_3d.1} parent=0 // pred_region
    _
  $region9: #{spatial_transformer_x_pooled_3d.1} parent=0 // pred_fallthru
    _
  // Predicated region
  $region10: #{spatial_transformer_x_pooled_3d.1} parent=0 // pred_check
    _
  $region11: #{spatial_transformer_x_pooled_3d.1} parent=0 // pred_check_branch
    %13 = sbr.rel (0) target = $region13
  $region12: #{spatial_transformer_x_pooled_3d.1} parent=0 // pred_region
    _
  $region13: #{spatial_transformer_x_pooled_3d.1} parent=0 // pred_fallthru
    _
  %v14 = vld [vmem:[%s0] sm:$0xff]
  %v15 = vld [vmem:[%s0 + $0x8] sm:$0xff]
  %v16 = vld [vmem:[%s0 + $0x10] sm:$0xff]
  %v17 = vld [vmem:[%s0 + $0x18] sm:$0xff]
  %v18 = vld [vmem:[%s0 + $0x20] sm:$0xff]
  %v19 = vld [vmem:[%s0 + $0x28] sm:$0xff]
  %v20 = vld [vmem:[%s0 + $0x30] sm:$0xff]
  %v21 = vld [vmem:[%s0 + $0x38] sm:$0xff]
  %v22 = vld [vmem:[%s0 + $0x40] sm:$0xff]
  %v23 = vld [vmem:[%s0 + $0x48] sm:$0xff]
  %v24 = vld [vmem:[%s0 + $0x50] sm:$0xff]
  %v25 = vld [vmem:[%s0 + $0x58] sm:$0xff]
  %v26 = vld [vmem:[%s0 + $0x60] sm:$0xff]
  %v27 = vld [vmem:[%s0 + $0x68] sm:$0xff]
  %v28 = vld [vmem:[%s0 + $0x70] sm:$0xff]
  %v29 = vld [vmem:[%s0 + $0x78] sm:$0xff]
  %v30 = vld [vmem:[%s1] sm:$0xff]
  %v31 = vld [vmem:[%s1 + $0x8] sm:$0xff]
  %v32 = vld [vmem:[%s1 + $0x10] sm:$0xff]
  %v33 = vld [vmem:[%s1 + $0x18] sm:$0xff]
  %v34 = vld [vmem:[%s1 + $0x20] sm:$0xff]
  %v35 = vld [vmem:[%s1 + $0x28] sm:$0xff]
  %v36 = vld [vmem:[%s1 + $0x30] sm:$0xff]
  %v37 = vld [vmem:[%s1 + $0x38] sm:$0xff]
  %v38 = vld [vmem:[%s1 + $0x40] sm:$0xff]
  %v39 = vld [vmem:[%s1 + $0x48] sm:$0xff]
  %v40 = vld [vmem:[%s1 + $0x50] sm:$0xff]
  %v41 = vld [vmem:[%s1 + $0x58] sm:$0xff]
  %v42 = vld [vmem:[%s1 + $0x60] sm:$0xff]
  %v43 = vld [vmem:[%s1 + $0x68] sm:$0xff]
  %v44 = vld [vmem:[%s1 + $0x70] sm:$0xff]
  %v45 = vld [vmem:[%s1 + $0x78] sm:$0xff]
  %v46 = vld [vmem:[%s1 + $0x80] sm:$0xff]
  %v47 = vld [vmem:[%s1 + $0x88] sm:$0xff]
  %v48 = vld [vmem:[%s1 + $0x90] sm:$0xff]
  %v49 = vld [vmem:[%s1 + $0x98] sm:$0xff]
  %v50 = vld [vmem:[%s1 + $0xa0] sm:$0xff]
  %v51 = vld [vmem:[%s1 + $0xa8] sm:$0xff]
  %v52 = vld [vmem:[%s1 + $0xb0] sm:$0xff]
  %v53 = vld [vmem:[%s1 + $0xb8] sm:$0xff]
  %v54 = vld [vmem:[%s1 + $0xc0] sm:$0xff]
  %v55 = vld [vmem:[%s1 + $0xc8] sm:$0xff]
  %v56 = vld [vmem:[%s1 + $0xd0] sm:$0xff]
  %v57 = vld [vmem:[%s1 + $0xd8] sm:$0xff]
  %v58 = vld [vmem:[%s1 + $0xe0] sm:$0xff]
  %v59 = vld [vmem:[%s1 + $0xe8] sm:$0xff]
  %v60 = vld [vmem:[%s1 + $0xf0] sm:$0xff]
  %v61 = vld [vmem:[%s1 + $0xf8] sm:$0xff]
  %v62 = vld [vmem:[%s1 + $0x100] sm:$0xff]
  %v63 = vld [vmem:[%s1 + $0x108] sm:$0xff]
  %v64 = vld [vmem:[%s1 + $0x110] sm:$0xff]
  %v65 = vld [vmem:[%s1 + $0x118] sm:$0xff]
  %v66 = vld [vmem:[%s1 + $0x120] sm:$0xff]
  %v67 = vld [vmem:[%s1 + $0x128] sm:$0xff]
  %v68 = vld [vmem:[%s1 + $0x130] sm:$0xff]
  %v69 = vld [vmem:[%s1 + $0x138] sm:$0xff]
  %v70 = vld [vmem:[%s1 + $0x140] sm:$0xff]
  %v71 = vld [vmem:[%s1 + $0x148] sm:$0xff]
  %v72 = vld [vmem:[%s1 + $0x150] sm:$0xff]
  %v73 = vld [vmem:[%s1 + $0x158] sm:$0xff]
  %v74 = vld [vmem:[%s1 + $0x160] sm:$0xff]
  %v75 = vld [vmem:[%s1 + $0x168] sm:$0xff]
  %v76 = vld [vmem:[%s1 + $0x170] sm:$0xff]
  %v77 = vld [vmem:[%s1 + $0x178] sm:$0xff]
  %v78 = vld [vmem:[%s1 + $0x180] sm:$0xff]
  %v79 = vld [vmem:[%s1 + $0x188] sm:$0xff]
  %v80 = vld [vmem:[%s1 + $0x190] sm:$0xff]
  %v81 = vld [vmem:[%s1 + $0x198] sm:$0xff]
  %v82 = vld [vmem:[%s1 + $0x1a0] sm:$0xff]
  %v83 = vld [vmem:[%s1 + $0x1a8] sm:$0xff]
  %v84 = vld [vmem:[%s1 + $0x1b0] sm:$0xff]
  %v85 = vld [vmem:[%s1 + $0x1b8] sm:$0xff]
  %v86 = vld [vmem:[%s1 + $0x1c0] sm:$0xff]
  %v87 = vld [vmem:[%s1 + $0x1c8] sm:$0xff]
  %v88 = vld [vmem:[%s1 + $0x1d0] sm:$0xff]
  %v89 = vld [vmem:[%s1 + $0x1d8] sm:$0xff]
  %v90 = vld [vmem:[%s1 + $0x1e0] sm:$0xff]
  %v91 = vld [vmem:[%s1 + $0x1e8] sm:$0xff]
  %v92 = vld [vmem:[%s1 + $0x1f0] sm:$0xff]
  %v93 = vld [vmem:[%s1 + $0x1f8] sm:$0xff]
  %v94 = vld [vmem:[%s1 + $0x200] sm:$0xff]
  %v95 = vld [vmem:[%s1 + $0x208] sm:$0xff]
  %v96 = vld [vmem:[%s1 + $0x210] sm:$0xff]
  %v97 = vld [vmem:[%s1 + $0x218] sm:$0xff]
  %v98 = vld [vmem:[%s1 + $0x220] sm:$0xff]
  %v99 = vld [vmem:[%s1 + $0x228] sm:$0xff]
  %v100 = vld [vmem:[%s1 + $0x230] sm:$0xff]
  %v101 = vld [vmem:[%s1 + $0x238] sm:$0xff]
  %v102 = vld [vmem:[%s1 + $0x240] sm:$0xff]
  %v103 = vld [vmem:[%s1 + $0x248] sm:$0xff]
  %v104 = vld [vmem:[%s1 + $0x250] sm:$0xff]
  %v105 = vld [vmem:[%s1 + $0x258] sm:$0xff]
  %v106 = vld [vmem:[%s1 + $0x260] sm:$0xff]
  %v107 = vld [vmem:[%s1 + $0x268] sm:$0xff]
  %v108 = vld [vmem:[%s1 + $0x270] sm:$0xff]
  %v109 = vld [vmem:[%s1 + $0x278] sm:$0xff]
  %v110 = vld [vmem:[%s1 + $0x280] sm:$0xff]
  %v111 = vld [vmem:[%s1 + $0x288] sm:$0xff]
  %v112 = vld [vmem:[%s1 + $0x290] sm:$0xff]
  %v113 = vld [vmem:[%s1 + $0x298] sm:$0xff]
  %v114 = vld [vmem:[%s1 + $0x2a0] sm:$0xff]
  %v115 = vld [vmem:[%s1 + $0x2a8] sm:$0xff]
  %v116 = vld [vmem:[%s1 + $0x2b0] sm:$0xff]
  %v117 = vld [vmem:[%s1 + $0x2b8] sm:$0xff]
  %v118 = vld [vmem:[%s1 + $0x2c0] sm:$0xff]
  %v119 = vld [vmem:[%s1 + $0x2c8] sm:$0xff]
  %v120 = vld [vmem:[%s1 + $0x2d0] sm:$0xff]
  %v121 = vld [vmem:[%s1 + $0x2d8] sm:$0xff]
  %v122 = vld [vmem:[%s1 + $0x2e0] sm:$0xff]
  %v123 = vld [vmem:[%s1 + $0x2e8] sm:$0xff]
  %v124 = vld [vmem:[%s1 + $0x2f0] sm:$0xff]
  %v125 = vld [vmem:[%s1 + $0x2f8] sm:$0xff]
  %v126 = vld [vmem:[%s1 + $0x300] sm:$0xff]
  %v127 = vld [vmem:[%s1 + $0x308] sm:$0xff]
  %v128 = vld [vmem:[%s1 + $0x310] sm:$0xff]
  %v129 = vld [vmem:[%s1 + $0x318] sm:$0xff]
  %v130 = vld [vmem:[%s1 + $0x320] sm:$0xff]
  %v131 = vld [vmem:[%s1 + $0x328] sm:$0xff]
  %v132 = vld [vmem:[%s1 + $0x330] sm:$0xff]
  %v133 = vld [vmem:[%s1 + $0x338] sm:$0xff]
  %v134 = vld [vmem:[%s1 + $0x340] sm:$0xff]
  %v135 = vld [vmem:[%s1 + $0x348] sm:$0xff]
  %v136 = vld [vmem:[%s1 + $0x350] sm:$0xff]
  %v137 = vld [vmem:[%s1 + $0x358] sm:$0xff]
  %v138 = vld [vmem:[%s1 + $0x360] sm:$0xff]
  %v139 = vld [vmem:[%s1 + $0x368] sm:$0xff]
  %v140 = vld [vmem:[%s1 + $0x370] sm:$0xff]
  %v141 = vld [vmem:[%s1 + $0x378] sm:$0xff]
  %v142 = vld [vmem:[%s1 + $0x380] sm:$0xff]
  %v143 = vld [vmem:[%s1 + $0x388] sm:$0xff]
  %v144 = vld [vmem:[%s1 + $0x390] sm:$0xff]
  %v145 = vld [vmem:[%s1 + $0x398] sm:$0xff]
  %v146 = vld [vmem:[%s1 + $0x3a0] sm:$0xff]
  %v147 = vld [vmem:[%s1 + $0x3a8] sm:$0xff]
  %v148 = vld [vmem:[%s1 + $0x3b0] sm:$0xff]
  %v149 = vld [vmem:[%s1 + $0x3b8] sm:$0xff]
  %v150 = vld [vmem:[%s1 + $0x3c0] sm:$0xff]
  %v151 = vld [vmem:[%s1 + $0x3c8] sm:$0xff]
  %v152 = vld [vmem:[%s1 + $0x3d0] sm:$0xff]
  %v153 = vld [vmem:[%s1 + $0x3d8] sm:$0xff]
  %v154 = vld [vmem:[%s1 + $0x3e0] sm:$0xff]
  %v155 = vld [vmem:[%s1 + $0x3e8] sm:$0xff]
  %v156 = vld [vmem:[%s1 + $0x3f0] sm:$0xff]
  %v157 = vld [vmem:[%s1 + $0x3f8] sm:$0xff]
  %v158 = vld [vmem:[%s2] sm:$0x1]
  %v160 = vperm.slane %v158, 0
  %162 = vmatpush.msra.mxu0 %v45
  %163 = vmatpush.msra.mxu0 %v44
  %164 = vmatpush.msra.mxu0 %v43
  %165 = vmatpush.msra.mxu0 %v42
  %166 = vmatpush.msra.mxu0 %v41
  %167 = vmatpush.msra.mxu0 %v40
  %168 = vmatpush.msra.mxu0 %v39
  %169 = vmatpush.msra.mxu0 %v38
  %170 = vmatpush.msra.mxu0 %v37
  %171 = vmatpush.msra.mxu0 %v36
  %172 = vmatpush.msra.mxu0 %v35
  %173 = vmatpush.msra.mxu0 %v34
  %174 = vmatpush.msra.mxu0 %v33
  %175 = vmatpush.msra.mxu0 %v32
  %176 = vmatpush.msra.mxu0 %v31
  %177 = vmatpush.msra.mxu0 %v30
  %178 = vmatmul.f32.gmra.mxu0 %v14
  %v179 = vpop.f32.mrf.mxu0
  %v180 = vadd.f32 %v160, %v179
  %181 = vmatmul.f32.gmra.mxu0 %v22
  %v182 = vpop.f32.mrf.mxu0
  %v183 = vadd.f32 %v160, %v182
  %184 = vdwg.mxu0
  %185 = vmatpush.msra.mxu0 %v61
  %186 = vmatpush.msra.mxu0 %v60
  %187 = vmatpush.msra.mxu0 %v59
  %188 = vmatpush.msra.mxu0 %v58
  %189 = vmatpush.msra.mxu0 %v57
  %190 = vmatpush.msra.mxu0 %v56
  %191 = vmatpush.msra.mxu0 %v55
  %192 = vmatpush.msra.mxu0 %v54
  %193 = vmatpush.msra.mxu0 %v53
  %194 = vmatpush.msra.mxu0 %v52
  %195 = vmatpush.msra.mxu0 %v51
  %196 = vmatpush.msra.mxu0 %v50
  %197 = vmatpush.msra.mxu0 %v49
  %198 = vmatpush.msra.mxu0 %v48
  %199 = vmatpush.msra.mxu0 %v47
  %200 = vmatpush.msra.mxu0 %v46
  %201 = vmatmul.f32.gmra.mxu0 %v15
  %v202 = vpop.f32.mrf.mxu0
  %v203 = vadd.f32 %v180, %v202
  %204 = vmatmul.f32.gmra.mxu0 %v23
  %v205 = vpop.f32.mrf.mxu0
  %v206 = vadd.f32 %v183, %v205
  %207 = vdwg.mxu0
  %208 = vmatpush.msra.mxu0 %v77
  %209 = vmatpush.msra.mxu0 %v76
  %210 = vmatpush.msra.mxu0 %v75
  %211 = vmatpush.msra.mxu0 %v74
  %212 = vmatpush.msra.mxu0 %v73
  %213 = vmatpush.msra.mxu0 %v72
  %214 = vmatpush.msra.mxu0 %v71
  %215 = vmatpush.msra.mxu0 %v70
  %216 = vmatpush.msra.mxu0 %v69
  %217 = vmatpush.msra.mxu0 %v68
  %218 = vmatpush.msra.mxu0 %v67
  %219 = vmatpush.msra.mxu0 %v66
  %220 = vmatpush.msra.mxu0 %v65
  %221 = vmatpush.msra.mxu0 %v64
  %222 = vmatpush.msra.mxu0 %v63
  %223 = vmatpush.msra.mxu0 %v62
  %224 = vmatmul.f32.gmra.mxu0 %v16
  %v225 = vpop.f32.mrf.mxu0
  %v226 = vadd.f32 %v203, %v225
  %227 = vmatmul.f32.gmra.mxu0 %v24
  %v228 = vpop.f32.mrf.mxu0
  %v229 = vadd.f32 %v206, %v228
  %230 = vdwg.mxu0
  %231 = vmatpush.msra.mxu0 %v93
  %232 = vmatpush.msra.mxu0 %v92
  %233 = vmatpush.msra.mxu0 %v91
  %234 = vmatpush.msra.mxu0 %v90
  %235 = vmatpush.msra.mxu0 %v89
  %236 = vmatpush.msra.mxu0 %v88
  %237 = vmatpush.msra.mxu0 %v87
  %238 = vmatpush.msra.mxu0 %v86
  %239 = vmatpush.msra.mxu0 %v85
  %240 = vmatpush.msra.mxu0 %v84
  %241 = vmatpush.msra.mxu0 %v83
  %242 = vmatpush.msra.mxu0 %v82
  %243 = vmatpush.msra.mxu0 %v81
  %244 = vmatpush.msra.mxu0 %v80
  %245 = vmatpush.msra.mxu0 %v79
  %246 = vmatpush.msra.mxu0 %v78
  %247 = vmatmul.f32.gmra.mxu0 %v17
  %v248 = vpop.f32.mrf.mxu0
  %v249 = vadd.f32 %v226, %v248
  %250 = vmatmul.f32.gmra.mxu0 %v25
  %v251 = vpop.f32.mrf.mxu0
  %v252 = vadd.f32 %v229, %v251
  %253 = vdwg.mxu0
  %254 = vmatpush.msra.mxu0 %v109
  %255 = vmatpush.msra.mxu0 %v108
  %256 = vmatpush.msra.mxu0 %v107
  %257 = vmatpush.msra.mxu0 %v106
  %258 = vmatpush.msra.mxu0 %v105
  %259 = vmatpush.msra.mxu0 %v104
  %260 = vmatpush.msra.mxu0 %v103
  %261 = vmatpush.msra.mxu0 %v102
  %262 = vmatpush.msra.mxu0 %v101
  %263 = vmatpush.msra.mxu0 %v100
  %264 = vmatpush.msra.mxu0 %v99
  %265 = vmatpush.msra.mxu0 %v98
  %266 = vmatpush.msra.mxu0 %v97
  %267 = vmatpush.msra.mxu0 %v96
  %268 = vmatpush.msra.mxu0 %v95
  %269 = vmatpush.msra.mxu0 %v94
  %270 = vmatmul.f32.gmra.mxu0 %v18
  %v271 = vpop.f32.mrf.mxu0
  %v272 = vadd.f32 %v249, %v271
  %273 = vmatmul.f32.gmra.mxu0 %v26
  %v274 = vpop.f32.mrf.mxu0
  %v275 = vadd.f32 %v252, %v274
  %276 = vdwg.mxu0
  %277 = vmatpush.msra.mxu0 %v125
  %278 = vmatpush.msra.mxu0 %v124
  %279 = vmatpush.msra.mxu0 %v123
  %280 = vmatpush.msra.mxu0 %v122
  %281 = vmatpush.msra.mxu0 %v121
  %282 = vmatpush.msra.mxu0 %v120
  %283 = vmatpush.msra.mxu0 %v119
  %284 = vmatpush.msra.mxu0 %v118
  %285 = vmatpush.msra.mxu0 %v117
  %286 = vmatpush.msra.mxu0 %v116
  %287 = vmatpush.msra.mxu0 %v115
  %288 = vmatpush.msra.mxu0 %v114
  %289 = vmatpush.msra.mxu0 %v113
  %290 = vmatpush.msra.mxu0 %v112
  %291 = vmatpush.msra.mxu0 %v111
  %292 = vmatpush.msra.mxu0 %v110
  %293 = vmatmul.f32.gmra.mxu0 %v19
  %v294 = vpop.f32.mrf.mxu0
  %v295 = vadd.f32 %v272, %v294
  %296 = vmatmul.f32.gmra.mxu0 %v27
  %v297 = vpop.f32.mrf.mxu0
  %v298 = vadd.f32 %v275, %v297
  %299 = vdwg.mxu0
  %300 = vmatpush.msra.mxu0 %v141
  %301 = vmatpush.msra.mxu0 %v140
  %302 = vmatpush.msra.mxu0 %v139
  %303 = vmatpush.msra.mxu0 %v138
  %304 = vmatpush.msra.mxu0 %v137
  %305 = vmatpush.msra.mxu0 %v136
  %306 = vmatpush.msra.mxu0 %v135
  %307 = vmatpush.msra.mxu0 %v134
  %308 = vmatpush.msra.mxu0 %v133
  %309 = vmatpush.msra.mxu0 %v132
  %310 = vmatpush.msra.mxu0 %v131
  %311 = vmatpush.msra.mxu0 %v130
  %312 = vmatpush.msra.mxu0 %v129
  %313 = vmatpush.msra.mxu0 %v128
  %314 = vmatpush.msra.mxu0 %v127
  %315 = vmatpush.msra.mxu0 %v126
  %316 = vmatmul.f32.gmra.mxu0 %v20
  %v317 = vpop.f32.mrf.mxu0
  %v318 = vadd.f32 %v295, %v317
  %319 = vmatmul.f32.gmra.mxu0 %v28
  %v320 = vpop.f32.mrf.mxu0
  %v321 = vadd.f32 %v298, %v320
  %322 = vdwg.mxu0
  %323 = vmatpush.msra.mxu0 %v157
  %324 = vmatpush.msra.mxu0 %v156
  %325 = vmatpush.msra.mxu0 %v155
  %326 = vmatpush.msra.mxu0 %v154
  %327 = vmatpush.msra.mxu0 %v153
  %328 = vmatpush.msra.mxu0 %v152
  %329 = vmatpush.msra.mxu0 %v151
  %330 = vmatpush.msra.mxu0 %v150
  %331 = vmatpush.msra.mxu0 %v149
  %332 = vmatpush.msra.mxu0 %v148
  %333 = vmatpush.msra.mxu0 %v147
  %334 = vmatpush.msra.mxu0 %v146
  %335 = vmatpush.msra.mxu0 %v145
  %336 = vmatpush.msra.mxu0 %v144
  %337 = vmatpush.msra.mxu0 %v143
  %338 = vmatpush.msra.mxu0 %v142
  %339 = vmatmul.f32.gmra.mxu0 %v21
  %v340 = vpop.f32.mrf.mxu0
  %v341 = vadd.f32 %v318, %v340
  %342 = vmatmul.f32.gmra.mxu0 %v29
  %v343 = vpop.f32.mrf.mxu0
  %v344 = vadd.f32 %v321, %v343
  %345 = vdwg.mxu0
  %346 = vst [vmem:[%s3] sm:$0xff] %v341
  %347 = vst [vmem:[%s3 + $0x8] sm:$0xff] %v344
  // Predicated region
  $region14: #{spatial_transformer_x_pooled_3d.1} parent=0 // pred_check
    _
  $region15: #{spatial_transformer_x_pooled_3d.1} parent=0 // pred_check_branch
    %349 = sbr.rel (0) target = $region17
  $region16: #{spatial_transformer_x_pooled_3d.1} parent=0 // pred_region
    _
  $region17: #{spatial_transformer_x_pooled_3d.1} parent=0 // pred_fallthru
    _
  // Predicated region
  $region18: #{spatial_transformer_x_pooled_3d.1} parent=0 // pred_check
    _
  $region19: #{spatial_transformer_x_pooled_3d.1} parent=0 // pred_check_branch
    %351 = sbr.rel (0) target = $region21
  $region20: #{spatial_transformer_x_pooled_3d.1} parent=0 // pred_region
    _
  $region21: #{spatial_transformer_x_pooled_3d.1} parent=0 // pred_fallthru
    _

</llo_original>
